<compile_context>
chip_gen: v5e
topology: v5e:2x2
jax: 0.10.0
libtpu: 0.0.40
codegen_flags: <defaults>
</compile_context>

<pallas_src>
import jax
import jax.numpy as jnp
from jax.experimental import pallas as pl
from jax.experimental.pallas import tpu as pltpu

EPS = 1e-15  # same epsilon used by nff's `norm`

_SINGLE_BLOCK_MAX = 1024               # N up to this -> one exact block
_VMEM_BUDGET = 40 * 1024 * 1024        # shrink tm above this footprint
_VMEM_CAP = 48 * 1024 * 1024           # never request near v7x's 64 MiB


def _round_up(x, m):
    return (x + m - 1) // m * m


def _cdiv(a, b):
    return (a + b - 1) // b


def _vmem_estimate(tm, F):
    """f32 bytes: double-buffered I/O blocks + in-kernel intermediates + weights."""
    io = 2 * (4 * tm * F + tm)          # (s, 3x v) input blocks + (1,tm) out, x2 buffers
    interm = 8 * tm * F                 # reshaped v slab + wv + nrm + h
    weights = 3 * F * F + 4 * F + 8     # W1.T, W2.T(2F,F), b2, w3 row, b3
    return 4 * (io + interm + weights)


def _select_tiling(N, F, tm):
    """Pick row tile + grid: big tiles, >=2 (preferably even) blocks, VMEM-safe."""
    if N <= _SINGLE_BLOCK_MAX and _vmem_estimate(N, F) <= _VMEM_BUDGET:
        return N, 1                                    # one exact full-dim block
    tm_eff = max(min(tm, _round_up(_cdiv(N, 2), 128)), 128)
    grid = _cdiv(N, tm_eff)
    if grid > 1 and grid % 2 == 1:                     # prefer an even grid (v7x 2 TCs)
        tm_even = max(_round_up(_cdiv(N, grid + 1), 128), 128)
        if _cdiv(N, tm_even) % 2 == 0:
            tm_eff, grid = tm_even, _cdiv(N, tm_even)
    while _vmem_estimate(tm_eff, F) > _VMEM_BUDGET and tm_eff > 128:
        tm_eff = max(_round_up(tm_eff // 2, 128), 128)
        grid = _cdiv(N, tm_eff)
    return tm_eff, grid


def _make_kernel(F, fuse_concat):
    def kernel(s_ref, v_ref, w1t_ref, w2t_ref, b2_ref, w3_ref, b3_ref, out_ref):
        tm = s_ref.shape[0]
        s = s_ref[...]                                        # (tm, F)
        w1t = w1t_ref[...]                                    # (F, F)

        # --- W1 applied to all 3 spatial components ------------------------
        if tm % 8 == 0:
            # One fused MXU push; the (3,tm,F)->(3*tm,F) merge is a
            # layout-preserving view when tm is sublane-aligned.
            v = v_ref[...].reshape(3 * tm, F)
            wv = jnp.dot(v, w1t, preferred_element_type=jnp.float32)
            wv = wv.reshape(3, tm, F)
            sq = jnp.sum(wv * wv, axis=0)
        else:
            # Fallback: per-component matmuls (avoids a materialized reshape).
            sq = jnp.zeros((tm, F), jnp.float32)
            for c in range(3):
                wvc = jnp.dot(v_ref[c], w1t, preferred_element_type=jnp.float32)
                sq = sq + wvc * wvc
        nrm = jnp.sqrt(sq + 3.0 * EPS)                        # (tm, F)

        # --- Dense(2F -> F) + bias; concat folded into the weight ----------
        if fuse_concat:
            # F % 128 == 0: lane-aligned concat, single MXU matmul with K=2F.
            cat = jnp.concatenate([nrm, s], axis=-1)          # (tm, 2F)
            h = jnp.dot(cat, w2t_ref[...],
                        preferred_element_type=jnp.float32) + b2_ref[...]
        else:
            # Split weight halves (static ref slices): no XLU lane shifts.
            h = (jnp.dot(nrm, w2t_ref[:F, :], preferred_element_type=jnp.float32)
                 + jnp.dot(s, w2t_ref[F:, :], preferred_element_type=jnp.float32)
                 + b2_ref[...])
        h = h * jax.nn.sigmoid(h)                             # swish / SiLU (EUP slot)

        # --- Dense(F -> 1) + bias, emitted as a lane-dense (1, tm) row ------
        # Contraction on dim 1 of both operands is the MXU-native "RHS
        # transposed" form; no explicit XLU transpose of h is emitted.
        out_row = jax.lax.dot_general(
            w3_ref[...], h, (((1,), (1,)), ((), ())),
            preferred_element_type=jnp.float32)               # (1, tm)
        out_ref[...] = out_row + b3_ref[0]

    return kernel


def gated_invariant(s_i, v_sm, params, *, tm=4096):
    """GatedInvariant forward.

    s_i : (N, F) float32 scalar features.
    v_sm: (3, N, F) float32 vector features, spatial-major.  Keep v in this
          layout persistently (or transpose once at setup); a per-call
          (N,F,3)->(3,N,F) transpose would ~double the HBM traffic of this
          memory-bound kernel.
    Returns (new_s of shape (N, 1), None) to match the PyTorch module.
    """
    N, F = s_i.shape
    assert v_sm.shape == (3, N, F)

    tm_eff, grid = _select_tiling(N, F, tm)

    # ---- weight prep (tiny F^2 arrays; cache these in a real model) --------
    w1, w2, b2, w3, b3 = (params["w1"], params["w2"], params["b2"],
                          params["w3"], params["b3"])
    w1t = w1.T                                   # (F, F)
    w2t = w2.T                                   # (2F, F): rows [:F] -> norm, [F:] -> s
    b2r = b2.reshape(1, F)
    w3r = w3.reshape(1, F)
    b3r = b3.reshape(1).astype(jnp.float32)      # scalar bias -> SMEM
    # TODO(synk): if model numerics allow, feed s/v/weights as bf16 (keep f32
    # accumulators via preferred_element_type) for ~2x HBM-bound throughput.

    # ---- VMEM: accurate estimate (incl. intermediates), explicit limit -----
    vmem_est = _vmem_estimate(tm_eff, F)
    vmem_limit = int(min(max(int(1.5 * vmem_est), 16 * 1024 * 1024), _VMEM_CAP))

    fuse_concat = (F % 128 == 0)
    kernel = _make_kernel(F, fuse_concat)
    full = lambda i: (0, 0)

    out = pl.pallas_call(
        kernel,
        out_shape=jax.ShapeDtypeStruct((1, N), jnp.float32),
        grid_spec=pltpu.PrefetchScalarGridSpec(
            num_scalar_prefetch=0,
            grid=(grid,),
            in_specs=[
                pl.BlockSpec((tm_eff, F), lambda i: (i, 0)),        # s rows
                pl.BlockSpec((3, tm_eff, F), lambda i: (0, i, 0)),  # v rows (spatial-major)
                pl.BlockSpec((F, F), full),                         # W1.T
                pl.BlockSpec((2 * F, F), full),                     # W2.T (norm|s halves)
                pl.BlockSpec((1, F), full),                         # b2
                pl.BlockSpec((1, F), full),                         # W3 row
                pl.BlockSpec(memory_space=pltpu.MemorySpace.SMEM),  # b3 scalar
            ],
            out_specs=pl.BlockSpec((1, tm_eff), lambda i: (0, i)),  # lane-dense row
        ),
        compiler_params=pltpu.CompilerParams(
            dimension_semantics=("parallel",),
            vmem_limit_bytes=vmem_limit,
        ),
    )(s_i, v_sm, w1t, w2t, b2r, w3r, b3r)

    # NOTE: for ragged N the last (partial) block computes garbage for rows
    # >= N; those lanes are masked on store / never exist in the (1, N) output.
    new_s = out[0].reshape(N, 1)
    return new_s, None


def reference(s_i, v_i, params):
    """Pure-JAX reference mirroring the PyTorch forward (v_i is (N, F, 3))."""
    w1, w2, b2, w3, b3 = (params["w1"], params["w2"], params["b2"],
                          params["w3"], params["b3"])
    w_v_1 = jnp.einsum("ij,kjl->kil", w1, v_i)                # (N, F, 3)
    nrm = jnp.sqrt(((w_v_1 ** 2) + EPS).sum(-1))              # (N, F)
    cat_s = jnp.concatenate([nrm, s_i], axis=-1)              # (N, 2F)
    h = cat_s @ w2.T + b2
    h = h * jax.nn.sigmoid(h)                                 # swish
    return h @ w3.T + b3


if __name__ == "__main__":
    N, F = 16, 32   # num atoms, feat_dim
    key = jax.random.PRNGKey(0)
    ks = jax.random.split(key, 7)

    # Deterministic synthetic parameters (PyTorch weight convention: (out, in)).
    params = {
        "w1": 0.1 * jax.random.normal(ks[0], (F, F), jnp.float32),
        "w2": 0.1 * jax.random.normal(ks[1], (F, 2 * F), jnp.float32),
        "b2": 0.1 * jax.random.normal(ks[2], (F,), jnp.float32),
        "w3": 0.1 * jax.random.normal(ks[3], (1, F), jnp.float32),
        "b3": 0.1 * jax.random.normal(ks[4], (1,), jnp.float32),
    }
    s_i = jax.random.normal(ks[5], (N, F), jnp.float32)
    v_i = jax.random.normal(ks[6], (N, F, 3), jnp.float32)

    # Hoisted ONCE: spatial-major layout for v (a model would store it this way).
    v_sm = jnp.transpose(v_i, (2, 0, 1))                      # (3, N, F)

    new_s, none_out = gated_invariant(s_i, v_sm, params)
    new_s = jax.block_until_ready(new_s)

    ref = jax.block_until_ready(reference(s_i, v_i, params))
    assert new_s.shape == (N, 1) and none_out is None
    assert jnp.allclose(new_s, ref, rtol=1e-5, atol=1e-5), \
        f"max err {jnp.max(jnp.abs(new_s - ref))}"
    print("KERNEL_OK")
</pallas_src>

<mosaic_0001>
module attributes {stable_mosaic.version = 11 : i64} {
  func.func @kernel(%arg0: i32, %arg1: memref<16x32xf32, #tpu.memory_space<vmem>>, %arg2: memref<3x16x32xf32, #tpu.memory_space<vmem>>, %arg3: memref<32x32xf32, #tpu.memory_space<vmem>>, %arg4: memref<64x32xf32, #tpu.memory_space<vmem>>, %arg5: memref<1x32xf32, #tpu.memory_space<vmem>>, %arg6: memref<1x32xf32, #tpu.memory_space<vmem>>, %arg7: memref<1xf32, #tpu.memory_space<smem>>, %arg8: memref<1x16xf32, #tpu.memory_space<vmem>>) attributes {dimension_semantics = [#tpu.dimension_semantics<parallel>], iteration_bounds = array<i64: 1>, scalar_prefetch = 0 : i64, scratch_operands = 0 : i64, tpu.core_type = #tpu.core_type<tc>, window_params = [{transform_indices = @transform_0, window_bounds = array<i64: 16, 32>}, {transform_indices = @transform_1, window_bounds = array<i64: 3, 16, 32>}, {pipeline_mode = #tpu.pipeline_mode<synchronous>, transform_indices = @transform_2, window_bounds = array<i64: 32, 32>}, {pipeline_mode = #tpu.pipeline_mode<synchronous>, transform_indices = @transform_3, window_bounds = array<i64: 64, 32>}, {pipeline_mode = #tpu.pipeline_mode<synchronous>, transform_indices = @transform_4, window_bounds = array<i64: 1, 32>}, {pipeline_mode = #tpu.pipeline_mode<synchronous>, transform_indices = @transform_5, window_bounds = array<i64: 1, 32>}, {transform_indices = @transform_6, window_bounds = array<i64: 1>}, {transform_indices = @transform_7, window_bounds = array<i64: 1, 16>}]} {
    %c0 = arith.constant 0 : index
    %c0_0 = arith.constant 0 : index
    %0 = vector.load %arg1[%c0, %c0_0] : memref<16x32xf32, #tpu.memory_space<vmem>>, vector<16x32xf32>
    %c0_1 = arith.constant 0 : index
    %c0_2 = arith.constant 0 : index
    %1 = vector.load %arg3[%c0_1, %c0_2] : memref<32x32xf32, #tpu.memory_space<vmem>>, vector<32x32xf32>
    %c0_3 = arith.constant 0 : index
    %c0_4 = arith.constant 0 : index
    %c0_5 = arith.constant 0 : index
    %2 = vector.load %arg2[%c0_3, %c0_4, %c0_5] : memref<3x16x32xf32, #tpu.memory_space<vmem>>, vector<3x16x32xf32>
    %3 = vector.shape_cast %2 : vector<3x16x32xf32> to vector<48x32xf32>
    %cst = arith.constant dense<0.000000e+00> : vector<48x32xf32>
    %4 = tpu.matmul %3, %1, %cst {dimension_numbers = #tpu.dot_dimension_numbers<[1], [0], [0], [1], [0, 0, 1, 1], [], []>} : vector<48x32xf32>, vector<32x32xf32>, vector<48x32xf32> -> vector<48x32xf32>
    %5 = vector.shape_cast %4 : vector<48x32xf32> to vector<3x16x32xf32>
    %6 = arith.mulf %5, %5 : vector<3x16x32xf32>
    %cst_6 = arith.constant dense<0.000000e+00> : vector<16x32xf32>
    %7 = vector.multi_reduction <add>, %6, %cst_6 [0] : vector<3x16x32xf32> to vector<16x32xf32>
    %cst_7 = arith.constant 3.000000e-15 : f32
    %8 = vector.broadcast %cst_7 : f32 to vector<16x32xf32>
    %9 = arith.addf %7, %8 : vector<16x32xf32>
    %10 = math.sqrt %9 : vector<16x32xf32>
    %c0_8 = arith.constant 0 : index
    %c0_9 = arith.constant 0 : index
    %11 = vector.load %arg4[%c0_8, %c0_9] : memref<64x32xf32, #tpu.memory_space<vmem>>, vector<32x32xf32>
    %cst_10 = arith.constant dense<0.000000e+00> : vector<16x32xf32>
    %12 = tpu.matmul %10, %11, %cst_10 {dimension_numbers = #tpu.dot_dimension_numbers<[1], [0], [0], [1], [0, 0, 1, 1], [], []>} : vector<16x32xf32>, vector<32x32xf32>, vector<16x32xf32> -> vector<16x32xf32>
    %c32 = arith.constant 32 : index
    %c0_11 = arith.constant 0 : index
    %13 = vector.load %arg4[%c32, %c0_11] : memref<64x32xf32, #tpu.memory_space<vmem>>, vector<32x32xf32>
    %cst_12 = arith.constant dense<0.000000e+00> : vector<16x32xf32>
    %14 = tpu.matmul %0, %13, %cst_12 {dimension_numbers = #tpu.dot_dimension_numbers<[1], [0], [0], [1], [0, 0, 1, 1], [], []>} : vector<16x32xf32>, vector<32x32xf32>, vector<16x32xf32> -> vector<16x32xf32>
    %15 = arith.addf %12, %14 : vector<16x32xf32>
    %c0_13 = arith.constant 0 : index
    %c0_14 = arith.constant 0 : index
    %16 = vector.load %arg5[%c0_13, %c0_14] : memref<1x32xf32, #tpu.memory_space<vmem>>, vector<1x32xf32>
    %17 = vector.broadcast %16 : vector<1x32xf32> to vector<16x32xf32>
    %18 = arith.addf %15, %17 : vector<16x32xf32>
    %19 = arith.negf %18 : vector<16x32xf32>
    %20 = math.exp %19 : vector<16x32xf32>
    %cst_15 = arith.constant 1.000000e+00 : f32
    %21 = vector.broadcast %cst_15 : f32 to vector<16x32xf32>
    %22 = arith.addf %21, %20 : vector<16x32xf32>
    %23 = arith.divf %21, %22 : vector<16x32xf32>
    %24 = arith.mulf %18, %23 : vector<16x32xf32>
    %c0_16 = arith.constant 0 : index
    %c0_17 = arith.constant 0 : index
    %25 = vector.load %arg6[%c0_16, %c0_17] : memref<1x32xf32, #tpu.memory_space<vmem>>, vector<1x32xf32>
    %cst_18 = arith.constant dense<0.000000e+00> : vector<1x16xf32>
    %26 = tpu.matmul %25, %24, %cst_18 {dimension_numbers = #tpu.dot_dimension_numbers<[1], [1], [0], [0], [0, 0, 1, 0], [], []>} : vector<1x32xf32>, vector<16x32xf32>, vector<1x16xf32> -> vector<1x16xf32>
    %c0_19 = arith.constant 0 : index
    %27 = memref.load %arg7[%c0_19] : memref<1xf32, #tpu.memory_space<smem>>
    %28 = vector.broadcast %27 : f32 to vector<1x16xf32>
    %29 = arith.addf %26, %28 : vector<1x16xf32>
    %c0_20 = arith.constant 0 : index
    %c0_21 = arith.constant 0 : index
    %30 = vector.load %arg8[%c0_20, %c0_21] : memref<1x16xf32, #tpu.memory_space<vmem>>, vector<1x16xf32>
    tpu.vector_store %arg8[%c0_20, %c0_21], %29 {strides = array<i32>} : memref<1x16xf32, #tpu.memory_space<vmem>>, vector<1x16xf32>,
    return
  }
  func.func @transform_0(%arg0: i32) -> (i32, i32) {
    %c0_i32 = arith.constant 0 : i32
    %c0_i32_0 = arith.constant 0 : i32
    return %arg0, %c0_i32 : i32, i32
  }
  func.func @transform_1(%arg0: i32) -> (i32, i32, i32) {
    %c0_i32 = arith.constant 0 : i32
    %c0_i32_0 = arith.constant 0 : i32
    %c0_i32_1 = arith.constant 0 : i32
    return %c0_i32, %arg0, %c0_i32_0 : i32, i32, i32
  }
  func.func @transform_2(%arg0: i32) -> (i32, i32) {
    %c0_i32 = arith.constant 0 : i32
    %c0_i32_0 = arith.constant 0 : i32
    %c0_i32_1 = arith.constant 0 : i32
    return %c0_i32, %c0_i32_0 : i32, i32
  }
  func.func @transform_3(%arg0: i32) -> (i32, i32) {
    %c0_i32 = arith.constant 0 : i32
    %c0_i32_0 = arith.constant 0 : i32
    %c0_i32_1 = arith.constant 0 : i32
    return %c0_i32, %c0_i32_0 : i32, i32
  }
  func.func @transform_4(%arg0: i32) -> (i32, i32) {
    %c0_i32 = arith.constant 0 : i32
    %c0_i32_0 = arith.constant 0 : i32
    %c0_i32_1 = arith.constant 0 : i32
    return %c0_i32, %c0_i32_0 : i32, i32
  }
  func.func @transform_5(%arg0: i32) -> (i32, i32) {
    %c0_i32 = arith.constant 0 : i32
    %c0_i32_0 = arith.constant 0 : i32
    %c0_i32_1 = arith.constant 0 : i32
    return %c0_i32, %c0_i32_0 : i32, i32
  }
  func.func @transform_6(%arg0: i32) -> i32 {
    %c0_i32 = arith.constant 0 : i32
    %c0_i32_0 = arith.constant 0 : i32
    return %c0_i32 : i32
  }
  func.func @transform_7(%arg0: i32) -> (i32, i32) {
    %c0_i32 = arith.constant 0 : i32
    %c0_i32_0 = arith.constant 0 : i32
    return %c0_i32, %arg0 : i32, i32
  }
}

</mosaic_0001>

<llo_original>
// kernel: tpu_custom_call.1
$region0: #{tpu_custom_call.1}
  #allocation0 [shape = 'u32[]', space=smem, size = 0x4, offset = 0x4, fixed_abs, tag = 'smem constant byte address 0x4 - core index']
  #allocation1 [shape = 'u32[72,128]{1,0:T(1,128)}', space=vmem, size = 0x9000, scoped, tag = 'internal scratch']
  #allocation2 [shape = 'f32[1]{0:T(128)S(6)}', space=smem, size = 0x200, scoped, tag = 'scoped memory for tpu_custom_call.1']
  %s0 = inlined_call_operand.vmem [shape: f32[16,32], index: 0, kind: input, shape index: {}]
  %s1 = inlined_call_operand.vmem [shape: f32[3,16,32], index: 1, kind: input, shape index: {}]
  %s2 = inlined_call_operand.vmem [shape: f32[32,32], index: 2, kind: input, shape index: {}]
  %s3 = inlined_call_operand.vmem [shape: f32[64,32], index: 3, kind: input, shape index: {}]
  %s4 = inlined_call_operand.vmem [shape: f32[1,32], index: 4, kind: input, shape index: {}]
  %s5 = inlined_call_operand.vmem [shape: f32[1,32], index: 5, kind: input, shape index: {}]
  %s6 = inlined_call_operand.<no memory space> [shape: f32[1], index: 6, kind: input, shape index: {}]
  %s7 = inlined_call_operand.hbm [shape: f32[1,16], index: 7, kind: output, shape index: {}]
  %s8 = sld [smem:[#allocation0]]
  $region38: #{tpu_custom_call.1} parent=0
    _
  %s10 = ssub.s32 1, %s8
  %s11 = scalar_select 0, %s10, %s8
  %12 = sst [smem:[#allocation2]] %s6
  $region1: #{tpu_custom_call.1} parent=0
    #allocation3 [shape = 'u8[512]{0}', space=vmem, size = 0x400, scoped, tag = 'output window, operand 0, single buffered']
    #allocation4 [shape = 's32[1]{0}', space=sflag, size = 0x4, scoped, tag = 'scoped memory for tpu_custom_call.1']
    %13 = vsyncpa [#allocation4], 0
    // Predicated region
    $region2: #{tpu_custom_call.1} parent=1 // pred_check
      _
    $region3: #{tpu_custom_call.1} parent=1 // pred_check_branch
      %15 = sbr.rel (0) target = $region5
    $region4: #{tpu_custom_call.1} parent=1 // pred_region
      _
    $region5: #{tpu_custom_call.1} parent=1 // pred_fallthru
      _
    // Predicated region
    $region6: #{tpu_custom_call.1} parent=1 // pred_check
      _
    $region7: #{tpu_custom_call.1} parent=1 // pred_check_branch
      %17 = sbr.rel (0) target = $region9
    $region8: #{tpu_custom_call.1} parent=1 // pred_region
      _
    $region9: #{tpu_custom_call.1} parent=1 // pred_fallthru
      _
    // Predicated region
    $region10: #{tpu_custom_call.1} parent=1 // pred_check
      _
    $region11: #{tpu_custom_call.1} parent=1 // pred_check_branch
      %19 = sbr.rel (0) target = $region13
    $region12: #{tpu_custom_call.1} parent=1 // pred_region
      _
    $region13: #{tpu_custom_call.1} parent=1 // pred_fallthru
      _
    // Predicated region
    $region14: #{tpu_custom_call.1} parent=1 // pred_check
      _
    $region15: #{tpu_custom_call.1} parent=1 // pred_check_branch
      %21 = sbr.rel (0) target = $region17
    $region16: #{tpu_custom_call.1} parent=1 // pred_region
      _
    $region17: #{tpu_custom_call.1} parent=1 // pred_fallthru
      _
    // Predicated region
    $region18: #{tpu_custom_call.1} parent=1 // pred_check
      _
    $region19: #{tpu_custom_call.1} parent=1 // pred_check_branch
      %23 = sbr.rel (0) target = $region21
    $region20: #{tpu_custom_call.1} parent=1 // pred_region
      _
    $region21: #{tpu_custom_call.1} parent=1 // pred_fallthru
      _
    // Predicated region
    $region22: #{tpu_custom_call.1} parent=1 // pred_check
      _
    $region23: #{tpu_custom_call.1} parent=1 // pred_check_branch
      %25 = sbr.rel (0) target = $region25
    $region24: #{tpu_custom_call.1} parent=1 // pred_region
      _
    $region25: #{tpu_custom_call.1} parent=1 // pred_fallthru
      _
    // Predicated region
    $region26: #{tpu_custom_call.1} parent=1 // pred_check
      _
    $region27: #{tpu_custom_call.1} parent=1 // pred_check_branch
      %27 = sbr.rel (0) target = $region29
    $region28: #{tpu_custom_call.1} parent=1 // pred_region
      _
    $region29: #{tpu_custom_call.1} parent=1 // pred_fallthru
      _
    %v28 = vld [vmem:[%s0] sm:$0xff]
    %v29 = vld [vmem:[%s0 + $0x8] sm:$0xff]
    %v30 = vld [vmem:[%s2] sm:$0xff]
    %v31 = vld [vmem:[%s2 + $0x8] sm:$0xff]
    %v32 = vld [vmem:[%s2 + $0x10] sm:$0xff]
    %v33 = vld [vmem:[%s2 + $0x18] sm:$0xff]
    %v34 = vld [vmem:[%s1] sm:$0xff]
    %v35 = vld [vmem:[%s1 + $0x8] sm:$0xff]
    %v36 = vld [vmem:[%s1 + $0x10] sm:$0xff]
    %v37 = vld [vmem:[%s1 + $0x18] sm:$0xff]
    %v38 = vld [vmem:[%s1 + $0x20] sm:$0xff]
    %v39 = vld [vmem:[%s1 + $0x28] sm:$0xff]
    %vm40 = vcmask 261120
    %v42 = vsel %vm40, %v34, 0
    %v45 = vsel %vm40, %v35, 0
    %v48 = vsel %vm40, %v36, 0
    %v51 = vsel %vm40, %v37, 0
    %v54 = vsel %vm40, %v38, 0
    %v57 = vsel %vm40, %v39, 0
    %59 = vmatpush.msra.mxu0 0.0
    %60 = vmatpush.msra.mxu0 0.0
    %61 = vmatpush.msra.mxu0 0.0
    %62 = vmatpush.msra.mxu0 0.0
    %63 = vmatpush.msra.mxu0 0.0
    %64 = vmatpush.msra.mxu0 0.0
    %65 = vmatpush.msra.mxu0 0.0
    %66 = vmatpush.msra.mxu0 0.0
    %67 = vmatpush.msra.mxu0 0.0
    %68 = vmatpush.msra.mxu0 0.0
    %69 = vmatpush.msra.mxu0 0.0
    %70 = vmatpush.msra.mxu0 0.0
    %71 = vmatpush.msra.mxu0 %v33
    %72 = vmatpush.msra.mxu0 %v32
    %73 = vmatpush.msra.mxu0 %v31
    %74 = vmatpush.msra.mxu0 %v30
    %75 = vmatmul.f32.gmra.mxu0 %v42
    %v76 = vpop.f32.mrf.mxu0
    %v77 = vadd.f32 0.0, %v76
    %78 = vmatmul.f32.gmra.mxu0 %v45
    %v79 = vpop.f32.mrf.mxu0
    %v80 = vadd.f32 0.0, %v79
    %81 = vmatmul.f32.gmra.mxu0 %v48
    %v82 = vpop.f32.mrf.mxu0
    %v83 = vadd.f32 0.0, %v82
    %84 = vmatmul.f32.gmra.mxu0 %v51
    %v85 = vpop.f32.mrf.mxu0
    %v86 = vadd.f32 0.0, %v85
    %87 = vmatmul.f32.gmra.mxu0 %v54
    %v88 = vpop.f32.mrf.mxu0
    %v89 = vadd.f32 0.0, %v88
    %90 = vmatmul.f32.gmra.mxu0 %v57
    %v91 = vpop.f32.mrf.mxu0
    %v92 = vadd.f32 0.0, %v91
    %93 = vdwg.mxu0
    %v94 = vmul.f32 %v77, %v77
    %v95 = vmul.f32 %v80, %v80
    %v96 = vmul.f32 %v83, %v83
    %v97 = vmul.f32 %v86, %v86
    %v98 = vmul.f32 %v89, %v89
    %v99 = vmul.f32 %v92, %v92
    %v100 = vsel %vm40, %v94, 0.0
    %v101 = vsel %vm40, %v96, 0.0
    %v102 = vadd.f32 %v100, %v101
    %v103 = vsel %vm40, %v98, 0.0
    %v104 = vadd.f32 %v102, %v103
    %v105 = vsel %vm40, %v95, 0.0
    %v106 = vsel %vm40, %v97, 0.0
    %v107 = vadd.f32 %v105, %v106
    %v108 = vsel %vm40, %v99, 0.0
    %v109 = vadd.f32 %v107, %v108
    %v110 = vadd.f32 %v104, 3e-15
    %v111 = vadd.f32 %v109, 3e-15
    %v112 = vrsqrt.pop %v110
    %v113 = vmul.f32 %v112, %v110
    %v114 = vmul.f32 %v113, %v112
    %v115 = vmul.f32 0.5, %v114
    %v116 = vsub.f32 1.5, %v115
    %v117 = vmul.f32 %v112, %v116
    %v118 = vmul.f32 %v110, %v117
    %vm119 = vcmp.eq.f32.partialorder %v110, inf
    %v120 = vsel %vm119, %v110, %v118
    %vm121 = vcmp.eq.f32.partialorder %v110, 0.0
    %v122 = vand.u32 %v110, 2147483648
    %v123 = vsel %vm121, %v122, %v120
    %v124 = vrsqrt.pop %v111
    %v125 = vmul.f32 %v124, %v111
    %v126 = vmul.f32 %v125, %v124
    %v127 = vmul.f32 0.5, %v126
    %v128 = vsub.f32 1.5, %v127
    %v129 = vmul.f32 %v124, %v128
    %v130 = vmul.f32 %v111, %v129
    %vm131 = vcmp.eq.f32.partialorder %v111, inf
    %v132 = vsel %vm131, %v111, %v130
    %vm133 = vcmp.eq.f32.partialorder %v111, 0.0
    %v134 = vand.u32 %v111, 2147483648
    %v135 = vsel %vm133, %v134, %v132
    %v136 = vld [vmem:[%s3] sm:$0xff]
    %v137 = vld [vmem:[%s3 + $0x8] sm:$0xff]
    %v138 = vld [vmem:[%s3 + $0x10] sm:$0xff]
    %v139 = vld [vmem:[%s3 + $0x18] sm:$0xff]
    %v140 = vld [vmem:[%s3 + $0x20] sm:$0xff]
    %v141 = vld [vmem:[%s3 + $0x28] sm:$0xff]
    %v142 = vld [vmem:[%s3 + $0x30] sm:$0xff]
    %v143 = vld [vmem:[%s3 + $0x38] sm:$0xff]
    %v145 = vsel %vm40, %v28, 0
    %v148 = vsel %vm40, %v29, 0
    %150 = vmatpush.msra.mxu0 0.0
    %151 = vmatpush.msra.mxu0 0.0
    %152 = vmatpush.msra.mxu0 0.0
    %153 = vmatpush.msra.mxu0 0.0
    %154 = vmatpush.msra.mxu0 0.0
    %155 = vmatpush.msra.mxu0 0.0
    %156 = vmatpush.msra.mxu0 0.0
    %157 = vmatpush.msra.mxu0 0.0
    %158 = vmatpush.msra.mxu0 0.0
    %159 = vmatpush.msra.mxu0 0.0
    %160 = vmatpush.msra.mxu0 0.0
    %161 = vmatpush.msra.mxu0 0.0
    %162 = vmatpush.msra.mxu0 %v143
    %163 = vmatpush.msra.mxu0 %v142
    %164 = vmatpush.msra.mxu0 %v141
    %165 = vmatpush.msra.mxu0 %v140
    %166 = vmatmul.f32.gmra.mxu0 %v145
    %v167 = vpop.f32.mrf.mxu0
    %v168 = vadd.f32 0.0, %v167
    %169 = vmatmul.f32.gmra.mxu0 %v148
    %v170 = vpop.f32.mrf.mxu0
    %v171 = vadd.f32 0.0, %v170
    %172 = vdwg.mxu0
    %v174 = vsel %vm40, %v123, 0
    %v177 = vsel %vm40, %v135, 0
    %179 = vmatpush.msra.mxu0 0.0
    %180 = vmatpush.msra.mxu0 0.0
    %181 = vmatpush.msra.mxu0 0.0
    %182 = vmatpush.msra.mxu0 0.0
    %183 = vmatpush.msra.mxu0 0.0
    %184 = vmatpush.msra.mxu0 0.0
    %185 = vmatpush.msra.mxu0 0.0
    %186 = vmatpush.msra.mxu0 0.0
    %187 = vmatpush.msra.mxu0 0.0
    %188 = vmatpush.msra.mxu0 0.0
    %189 = vmatpush.msra.mxu0 0.0
    %190 = vmatpush.msra.mxu0 0.0
    %191 = vmatpush.msra.mxu0 %v139
    %192 = vmatpush.msra.mxu0 %v138
    %193 = vmatpush.msra.mxu0 %v137
    %194 = vmatpush.msra.mxu0 %v136
    %195 = vmatmul.f32.gmra.mxu0 %v174
    %v196 = vpop.f32.mrf.mxu0
    %v197 = vadd.f32 %v168, %v196
    %198 = vmatmul.f32.gmra.mxu0 %v177
    %v199 = vpop.f32.mrf.mxu0
    %v200 = vadd.f32 %v171, %v199
    %201 = vdwg.mxu0
    %v202 = vld [vmem:[%s4] sm:$0x1]
    %v204 = vperm.slane %v202, 0
    %v206 = vadd.f32 %v197, %v204
    %v207 = vadd.f32 %v200, %v204
    %v208 = vxor.u32 %v206, 2147483648
    %v209 = vxor.u32 %v207, 2147483648
    %v210 = vmul.f32 %v208, 1.442695
    %v211 = vpow.pop %v210
    %v212 = vmul.f32 %v209, 1.442695
    %v213 = vpow.pop %v212
    %v214 = vadd.f32 %v211, 1.0
    %v215 = vadd.f32 %v213, 1.0
    %v216 = vrcp.pop %v214
    %v217 = vmul.f32 %v214, %v216
    %v218 = vsub.f32 1.0, %v217
    %v219 = vmul.f32 %v216, %v218
    %v220 = vadd.f32 %v216, %v219
    %vm221 = vweird.f32 %v214
    %vm222 = vweird.f32 %v216
    %vm223 = vmor %vm221, %vm222
    %v224 = vsel %vm223, %v216, %v220
    %v225 = vand.u32 2147483647, %v214
    %vm226 = vcmp.eq.f32.partialorder %v225, 8.507059e+37
    %v227 = vand.u32 %v214, 2147483648
    %v228 = vor.u32 1.1754944e-38, %v227
    %v229 = vsel %vm226, %v228, %v224
    %v230 = vmul.f32 1.0, %v229
    %v231 = vrcp.pop %v215
    %v232 = vmul.f32 %v215, %v231
    %v233 = vsub.f32 1.0, %v232
    %v234 = vmul.f32 %v231, %v233
    %v235 = vadd.f32 %v231, %v234
    %vm236 = vweird.f32 %v215
    %vm237 = vweird.f32 %v231
    %vm238 = vmor %vm236, %vm237
    %v239 = vsel %vm238, %v231, %v235
    %v240 = vand.u32 2147483647, %v215
    %vm241 = vcmp.eq.f32.partialorder %v240, 8.507059e+37
    %v242 = vand.u32 %v215, 2147483648
    %v243 = vor.u32 1.1754944e-38, %v242
    %v244 = vsel %vm241, %v243, %v239
    %v245 = vmul.f32 1.0, %v244
    %v246 = vmul.f32 %v206, %v230
    %v247 = vmul.f32 %v207, %v245
    %v248 = vld [vmem:[%s5] sm:$0x1]
    %s249 = sld [smem:[#allocation2]]
    %v250 = vstv %s249
    %v252 = vsel %vm40, %v248, 0
    %v255 = vsel %vm40, %v246, 0
    %v258 = vsel %vm40, %v247, 0
    %260 = vmatpush.xpose.msra.mxu0 0.0
    %261 = vmatpush.xpose.msra.mxu0 0.0
    %262 = vmatpush.xpose.msra.mxu0 0.0
    %263 = vmatpush.xpose.msra.mxu0 0.0
    %264 = vmatpush.xpose.msra.mxu0 0.0
    %265 = vmatpush.xpose.msra.mxu0 0.0
    %266 = vmatpush.xpose.msra.mxu0 0.0
    %267 = vmatpush.xpose.msra.mxu0 0.0
    %268 = vmatpush.xpose.msra.mxu0 0.0
    %269 = vmatpush.xpose.msra.mxu0 0.0
    %270 = vmatpush.xpose.msra.mxu0 0.0
    %271 = vmatpush.xpose.msra.mxu0 0.0
    %272 = vmatpush.xpose.msra.mxu0 0.0
    %273 = vmatpush.xpose.msra.mxu0 0.0
    %274 = vmatpush.xpose.msra.mxu0 %v258
    %275 = vmatpush.xpose.msra.mxu0 %v255
    %276 = vmatmul.f32.gmra.mxu0 %v252
    %v277 = vpop.f32.mrf.mxu0
    %v278 = vadd.f32 %v250, %v277
    %279 = vdwg.mxu0
    %vm280 = vcmask 122880
    %281 = vst.msk [vmem:[#allocation3] sm:$0x1] %vm280, %v278
    // Predicated region
    $region30: #{tpu_custom_call.1} parent=1 // pred_check
      _
    $region31: #{tpu_custom_call.1} parent=1 // pred_check_branch
      %283 = sbr.rel (0) target = $region33
    $region32: #{tpu_custom_call.1} parent=1 // pred_region
      %285 = vsyncadd [#allocation4], 0
      %s287 = sshll.u32 [#allocation3], 4
      %s288 = int_to_ptr.vmem [resolvable:$true] %s287
      %s289 = sshll.u32 %s7, 4
      %s290 = int_to_ptr.hbm [resolvable:$true] %s289
      %292 = dma.vmem_to_hbm [thread:$0]  %s288, 16, %s290, [#allocation4]
    $region33: #{tpu_custom_call.1} parent=1 // pred_fallthru
      _
    // Predicated region
    $region34: #{tpu_custom_call.1} parent=1 // pred_check
      _
    $region35: #{tpu_custom_call.1} parent=1 // pred_check_branch
      %294 = sbr.rel (0) target = $region37
    $region36: #{tpu_custom_call.1} parent=1 // pred_region
      %296 = dma.done [#allocation4], 16
    $region37: #{tpu_custom_call.1} parent=1 // pred_fallthru
      _
    %297 = vsyncpa [#allocation4], 1

</llo_original>
